<compile_context>
chip_gen: v7x
topology: tpu7x:2x2x1
jax: 0.10.0
libtpu: 0.0.40
codegen_flags: <defaults>
</compile_context>

<pallas_src>
import re
import functools

import jax
import jax.numpy as jnp
from jax.experimental import pallas as pl
from jax.experimental.pallas import tpu as pltpu


def _pool_seq_kernel(x_ref, o_ref, *, mode, fix, pool_w):
    """Adaptive-pool one spatial axis of a (1, C, ., .) block down to `fix`
    rows and emit the image_to_sequence feature layout (keep_tile, C*fix)."""
    x = x_ref[0]                                    # (C, H, Kt) or (C, Kt, W)
    if pool_w:                                      # row-wise: pool W, keep H
        x = jnp.swapaxes(x, 1, 2)                   # -> (C, W, Kt)
    x = x.astype(jnp.float32)                       # f32 accumulation
    C, L, K = x.shape                               # L: pooled len, K: kept tile

    if L % fix == 0:
        # Fast path: equal windows -> one reshape + one sublane reduction.
        win = L // fix
        xr = x.reshape(C * fix, win, K)
        pooled = jnp.mean(xr, axis=1) if mode == "avgpool" else jnp.max(xr, axis=1)
    else:
        # General adaptive-pooling windows (PyTorch boundary semantics).
        rows = []
        for o in range(fix):
            s = (o * L) // fix
            e = -(-((o + 1) * L) // fix)            # ceil div
            w = x[:, s:e, :]
            rows.append(jnp.mean(w, axis=1) if mode == "avgpool"
                        else jnp.max(w, axis=1))
        pooled = jnp.stack(rows, axis=1).reshape(C * fix, K)

    # (C*fix, K) -> (K, C*fix): lane-dense output, single unmasked store.
    o_ref[0] = pooled.T.astype(o_ref.dtype)


def _choose_tile(keep_len, col_bytes, budget=12 * 1024 * 1024, target=512):
    """Largest keep-axis tile keeping double-buffered blocks + f32 temps under
    `budget`; multiples of 128 when tiling, full axis if it already fits."""
    if keep_len * col_bytes <= budget:
        return int(keep_len)
    cap = max(128, (budget // max(col_bytes, 1)) // 128 * 128)
    return int(min(keep_len, target, cap))


def _pooled_sequence(x, fix, mode, columnwise):
    """Runs the fused pool+sequence kernel. Returns (keep_len, N, C*fix)."""
    N, C, H, W = x.shape
    if columnwise:
        keep_len, pool_len, pool_w = W, H, False
    else:
        keep_len, pool_len, pool_w = H, W, True

    isize = x.dtype.itemsize
    # bytes per kept column: 2x-buffered input + output blocks + f32 temporaries.
    col_bytes = 2 * C * (pool_len + fix) * isize + 4 * C * (pool_len + 2 * fix)
    tk = _choose_tile(keep_len, col_bytes)

    if columnwise:
        in_spec = pl.BlockSpec((1, C, H, tk), lambda n, k: (n, 0, 0, k))
    else:
        in_spec = pl.BlockSpec((1, C, tk, W), lambda n, k: (n, 0, k, 0))
    out_spec = pl.BlockSpec((1, tk, C * fix), lambda n, k: (n, k, 0))

    kernel = functools.partial(_pool_seq_kernel, mode=mode, fix=fix, pool_w=pool_w)
    seq_nkf = pl.pallas_call(
        kernel,
        out_shape=jax.ShapeDtypeStruct((N, keep_len, C * fix), x.dtype),
        grid=(N, pl.cdiv(keep_len, tk)),
        in_specs=[in_spec],
        out_specs=out_spec,
        compiler_params=pltpu.CompilerParams(
            dimension_semantics=("parallel", "parallel"),
            vmem_limit_bytes=32 * 1024 * 1024,
        ),
    )(x)
    # Cheap leading-axes swap (minor dim untouched): (N, keep, F) -> (keep, N, F).
    return jnp.transpose(seq_nkf, (1, 0, 2))


def image_pooling_sequencer(x, sequencer, columnwise=True):
    """Forward of laia ImagePoolingSequencer for plain (non-Padded) tensors.

    x: (N, C, H, W). Returns (W, N, C*fix) if columnwise else (H, N, C*fix),
    matching image_to_sequence's permute + view semantics.
    """
    m = re.match(r"^(avgpool|maxpool|none)-([1-9][0-9]*)$", sequencer)
    if m is None:
        raise ValueError("The value of the sequencer argument is not valid")
    mode, fix_size = m.group(1), int(m.group(2))
    N, C, H, W = x.shape

    if mode == "none":
        # Identity data path -> skip the kernel, just do the layout change.
        if columnwise and H != fix_size:
            raise ValueError(
                "Input images must have a fixed height of {} pixels".format(fix_size))
        if (not columnwise) and W != fix_size:
            raise ValueError(
                "Input images must have a fixed width of {} pixels".format(fix_size))
        if columnwise:
            return jnp.transpose(x, (3, 0, 1, 2)).reshape(W, N, C * H)
        return jnp.transpose(x, (2, 0, 1, 3)).reshape(H, N, C * W)

    # TODO(synk): PackedSequence output (return_packed=True) and PaddedTensor
    # per-sample size checks have no clean Pallas/JAX equivalent; the dense
    # sequence is returned instead.
    return _pooled_sequence(x, fix_size, mode, columnwise)


def _reference(x, sequencer, columnwise=True):
    """Pure-JAX reference for correctness checking."""
    m = re.match(r"^(avgpool|maxpool|none)-([1-9][0-9]*)$", sequencer)
    mode, fix_size = m.group(1), int(m.group(2))
    N, C, H, W = x.shape
    if columnwise:
        in_len, keep = H, W
        xin = x
    else:
        in_len, keep = W, H
        xin = jnp.transpose(x, (0, 1, 3, 2))
    rows = []
    for o in range(fix_size):
        s = (o * in_len) // fix_size
        e = -(-((o + 1) * in_len) // fix_size)
        win = xin[:, :, s:e, :]
        if mode == "avgpool":
            rows.append(jnp.mean(win, axis=2, keepdims=True))
        elif mode == "maxpool":
            rows.append(jnp.max(win, axis=2, keepdims=True))
        else:
            rows.append(win)
    pooled = jnp.concatenate(rows, axis=2)  # (N, C, fix, keep)
    return jnp.transpose(pooled, (3, 0, 1, 2)).reshape(keep, N, C * fix_size)


if __name__ == "__main__":
    key = jax.random.PRNGKey(0)
    x = jax.random.normal(key, (2, 4, 16, 16), dtype=jnp.float32)  # NCHW

    cases = [
        ("avgpool-8", True),
        ("maxpool-8", True),
        ("avgpool-8", False),
        ("maxpool-8", False),
        ("avgpool-5", True),     # non-divisible window path
        ("maxpool-5", False),
        ("none-16", True),
    ]
    ok = True
    for sequencer, columnwise in cases:
        out = jax.block_until_ready(
            image_pooling_sequencer(x, sequencer, columnwise=columnwise))
        ref = _reference(x, sequencer, columnwise=columnwise)
        if out.shape != ref.shape or not bool(
            jnp.allclose(out, ref, atol=1e-5, rtol=1e-5)
        ):
            ok = False
            print("MISMATCH:", sequencer, columnwise, out.shape, ref.shape)

    # bf16 I/O with f32 accumulation (bandwidth path on v6e/v7x).
    xb = x.astype(jnp.bfloat16)
    outb = jax.block_until_ready(image_pooling_sequencer(xb, "avgpool-8", True))
    refb = _reference(xb.astype(jnp.float32), "avgpool-8", True).astype(jnp.bfloat16)
    if outb.shape != refb.shape or not bool(
        jnp.allclose(outb.astype(jnp.float32), refb.astype(jnp.float32),
                     atol=5e-2, rtol=5e-2)
    ):
        ok = False
        print("MISMATCH: bf16 avgpool-8", outb.shape, refb.shape)

    if ok:
        print("KERNEL_OK")
</pallas_src>

<mosaic_0001>
module attributes {stable_mosaic.version = 11 : i64} {
  func.func @_pool_seq_kernel(%arg0: i32, %arg1: i32, %arg2: memref<1x4x16x16xf32, #tpu.memory_space<vmem>>, %arg3: memref<1x16x32xf32, #tpu.memory_space<vmem>>) attributes {dimension_semantics = [#tpu.dimension_semantics<parallel>, #tpu.dimension_semantics<parallel>], iteration_bounds = array<i64: 2, 1>, scalar_prefetch = 0 : i64, scratch_operands = 0 : i64, tpu.core_type = #tpu.core_type<tc>, window_params = [{transform_indices = @transform_0, window_bounds = array<i64: 1, 4, 16, 16>}, {transform_indices = @transform_1, window_bounds = array<i64: 1, 16, 32>}]} {
    %c0 = arith.constant 0 : index
    %c0_0 = arith.constant 0 : index
    %c0_1 = arith.constant 0 : index
    %c0_2 = arith.constant 0 : index
    %0 = vector.load %arg2[%c0, %c0_0, %c0_1, %c0_2] : memref<1x4x16x16xf32, #tpu.memory_space<vmem>>, vector<1x4x16x16xf32>
    %1 = vector.shape_cast %0 : vector<1x4x16x16xf32> to vector<4x16x16xf32>
    %2 = vector.shape_cast %1 : vector<4x16x16xf32> to vector<32x2x16xf32>
    %cst = arith.constant dense<0.000000e+00> : vector<32x16xf32>
    %3 = vector.multi_reduction <add>, %2, %cst [1] : vector<32x2x16xf32> to vector<32x16xf32>
    %cst_3 = arith.constant 2.000000e+00 : f32
    %4 = vector.broadcast %cst_3 : f32 to vector<32x16xf32>
    %5 = arith.divf %3, %4 : vector<32x16xf32>
    %6 = tpu.transpose %5, [1, 0] : vector<32x16xf32> -> vector<16x32xf32>
    %c0_4 = arith.constant 0 : index
    %c0_5 = arith.constant 0 : index
    %c0_6 = arith.constant 0 : index
    %7 = vector.load %arg3[%c0_4, %c0_5, %c0_6] : memref<1x16x32xf32, #tpu.memory_space<vmem>>, vector<1x16x32xf32>
    %8 = vector.shape_cast %7 : vector<1x16x32xf32> to vector<16x32xf32>
    %9 = vector.shape_cast %6 : vector<16x32xf32> to vector<1x16x32xf32>
    tpu.vector_store %arg3[%c0_4, %c0_5, %c0_6], %9 {strides = array<i32>} : memref<1x16x32xf32, #tpu.memory_space<vmem>>, vector<1x16x32xf32>,
    return
  }
  func.func @transform_0(%arg0: i32, %arg1: i32) -> (i32, i32, i32, i32) {
    %c0_i32 = arith.constant 0 : i32
    %c0_i32_0 = arith.constant 0 : i32
    %c0_i32_1 = arith.constant 0 : i32
    return %arg0, %c0_i32, %c0_i32_0, %arg1 : i32, i32, i32, i32
  }
  func.func @transform_1(%arg0: i32, %arg1: i32) -> (i32, i32, i32) {
    %c0_i32 = arith.constant 0 : i32
    %c0_i32_0 = arith.constant 0 : i32
    return %arg0, %arg1, %c0_i32 : i32, i32, i32
  }
}

</mosaic_0001>

<llo_original>
// kernel: tpu_custom_call.1
$region0: #{tpu_custom_call.1}
  #allocation0 [shape = 'u32[]', space=smem, size = 0x4, offset = 0x4, fixed_abs, tag = 'smem constant byte address 0x4 - core index']
  #allocation1 [shape = 'u32[144,128]{1,0:T(1,128)}', space=vmem, size = 0x12000, scoped, tag = 'internal scratch']
  %s0 = inlined_call_operand.hbm [shape: f32[2,4,16,16], index: 0, kind: input, shape index: {}]
  %s1 = inlined_call_operand.hbm [shape: f32[2,16,32], index: 1, kind: output, shape index: {}]
  %s2 = sld [smem:[#allocation0]]
  $region41: #{tpu_custom_call.1} parent=0
    _
  %s4 = ssub.s32 1, %s2
  %s5 = scalar_select 0, %s4, %s2
  $region1: #{tpu_custom_call.1} parent=0
    #allocation2 [shape = 'u8[65536]{0}', space=vmem, size = 0x10000, scoped, tag = 'input window, operand 0']
    #allocation3 [shape = 's32[2]{0}', space=sflag, size = 0x8, scoped, tag = 'scoped memory for tpu_custom_call.1']
    #allocation4 [shape = 's32[2]{0}', space=sflag, size = 0x8, scoped, tag = 'scoped memory for tpu_custom_call.1']
    #allocation5 [shape = 'u8[16384]{0}', space=vmem, size = 0x4000, scoped, tag = 'output window, operand 0']
    %6 = vsyncpa [#allocation3], 0
    %s7 = scalar_lea.sflag [#allocation3], 1
    %8 = vsyncpa %s7, 0
    %9 = vsyncpa [#allocation4], 0
    %s10 = scalar_lea.sflag [#allocation4], 1
    %11 = vsyncpa %s10, 0
    loop: start=0, step=1, limit=4
    $region2: #{tpu_custom_call.1} parent=1 // loop_pre_header
      _
    $region3: #{tpu_custom_call.1} parent=1 // loop_header
      %s13 = sphi 0, %s17
      %p14 = scmp.ge.s32.totalorder %s13, 4
      %s20 = sphi 0, %s32
      %s21 = sphi 0, %s28
      %s22 = sphi 0, %s20
      %s23 = sphi 0, %s21
      %s24 = sphi 0, %s22
      %s25 = sphi 0, %s23
      %s37 = sphi 0, %s39
      %s40 = sphi 0, %s37
      %s41 = sphi 0, %s40
      %s57 = sphi 0, %s41
      %s65 = sphi 0, %s67
      %s68 = sphi 0, %s65
      %s69 = sphi 0, %s68
      %s85 = sphi 0, %s69
    $region4: #{tpu_custom_call.1} parent=1 // loop_header_branch
      %16 = sbr.rel (%p14) target = $region8
    $region5: #{tpu_custom_call.1} parent=1 // loop_body
      %s18 = ssub.s32 %s13, 1
      %s19 = ssub.s32 %s13, 2
      %s26 = sadd.s32 1, %s21
      %p27 = scmp.ge.s32.totalorder %s26, 1
      %s28 = scalar_select %p27, 0, %s26
      %s29 = sadd.s32 1, %s20
      %s30 = scalar_select %p27, %s29, %s20
      %p31 = scmp.ge.s32.totalorder %s30, 2
      %s32 = scalar_select %p31, 0, %s30
      %s33 = ssub.s32 %s20, %s32
      %s34 = ssub.s32 %s21, %s28
      %s35 = sor.u32 %s33, %s34
      %p36 = scmp.eq.s32.totalorder %s35, 0
      %s38 = sadd.s32 %s37, 1
      %s39 = scalar_select %p36, %s37, %s38
      %p42 = pneg %p36
      %p43 = scmp.eq.s32.totalorder %s13, 1
      %p44 = por %p42, %p43
      %p45 = scmp.ne.s32.totalorder %s37, %s40
      %p46 = scmp.eq.s32.totalorder %s13, 0
      %p47 = por %p45, %p46
      %p48 = scmp.ne.s32.totalorder %s37, %s40
      %p49 = scmp.eq.s32.totalorder %s18, 1
      %p50 = por %p48, %p49
      %p51 = scmp.ne.s32.totalorder %s40, %s41
      %p52 = scmp.eq.s32.totalorder %s18, 0
      %p53 = por %p51, %p52
      %p54 = scmp.ne.s32.totalorder %s40, %s41
      %p55 = scmp.eq.s32.totalorder %s19, 1
      %p56 = por %p54, %p55
      %p58 = scmp.ne.s32.totalorder %s41, %s57
      %p59 = scmp.eq.s32.totalorder %s19, 0
      %p60 = por %p58, %p59
      %s61 = ssub.s32 %s20, %s32
      %s62 = ssub.s32 %s21, %s28
      %s63 = sor.u32 %s61, %s62
      %p64 = scmp.eq.s32.totalorder %s63, 0
      %s66 = sadd.s32 %s65, 1
      %s67 = scalar_select %p64, %s65, %s66
      %p70 = pneg %p64
      %p71 = scmp.eq.s32.totalorder %s13, 1
      %p72 = por %p70, %p71
      %p73 = scmp.ne.s32.totalorder %s65, %s68
      %p74 = scmp.eq.s32.totalorder %s13, 0
      %p75 = por %p73, %p74
      %p76 = scmp.ne.s32.totalorder %s65, %s68
      %p77 = scmp.eq.s32.totalorder %s18, 1
      %p78 = por %p76, %p77
      %p79 = scmp.ne.s32.totalorder %s68, %s69
      %p80 = scmp.eq.s32.totalorder %s18, 0
      %p81 = por %p79, %p80
      %p82 = scmp.ne.s32.totalorder %s68, %s69
      %p83 = scmp.eq.s32.totalorder %s19, 1
      %p84 = por %p82, %p83
      %p86 = scmp.ne.s32.totalorder %s69, %s85
      %p87 = scmp.eq.s32.totalorder %s19, 0
      %p88 = por %p86, %p87
      %p89 = scmp.le.s32.totalorder 1, %s13
      %p90 = scmp.lt.s32.totalorder %s13, 3
      %p91 = pnand %p89, %p90
      %p92 = pneg %p91
      // Predicated region
      $region9: #{tpu_custom_call.1} parent=5 // pred_check
        _
      $region10: #{tpu_custom_call.1} parent=5 // pred_check_branch
        %94 = sbr.rel (%p91) target = $region12
      $region11: #{tpu_custom_call.1} parent=5 // pred_region
        %s95 = ssub.s32 %s13, 1
      $region12: #{tpu_custom_call.1} parent=5 // pred_fallthru
        _
      %p96 = scmp.lt.s32.totalorder %s13, 2
      // Predicated region
      $region13: #{tpu_custom_call.1} parent=5 // pred_check
        %p97 = pneg %p96
      $region14: #{tpu_custom_call.1} parent=5 // pred_check_branch
        %99 = sbr.rel (%p97) target = $region16
      $region15: #{tpu_custom_call.1} parent=5 // pred_region
        // Predicated region
        $region17: #{tpu_custom_call.1} parent=15 // pred_check
          %p100 = pneg %p47
        $region18: #{tpu_custom_call.1} parent=15 // pred_check_branch
          %102 = sbr.rel (%p100) target = $region20
        $region19: #{tpu_custom_call.1} parent=15 // pred_region
          %s103 = sand.u32 %s37, 1
          %s104 = scalar_lea.sflag [#allocation3], %s103
          %s105 = sand.u32 %s37, 1
          %s106 = smul.addr %s105, 64
          %s107 = scalar_lea.vmem [#allocation2], %s106
          %s109 = ssub.s32 1024, 1024
          %110 = vsyncadd %s104, %s109
          %s111 = smul.addr %s20, 8
          %s112 = sadd.s32 %s21, %s111
          %s113 = smul.addr %s112, 128
          %s114 = scalar_lea.hbm %s0, %s113
          %s115 = sshll.u32 %s107, 4
          %s116 = int_to_ptr.vmem [resolvable:$true] %s115
          %121 = dma.hbm_to_vmem [thread:$0]  %s114, 1024, %s116, %s104, 128, 128, 8
        $region20: #{tpu_custom_call.1} parent=15 // pred_fallthru
          _
      $region16: #{tpu_custom_call.1} parent=5 // pred_fallthru
        _
      %p122 = scmp.le.s32.totalorder 1, %s13
      %p123 = scmp.lt.s32.totalorder %s13, 3
      %p124 = pnand %p122, %p123
      %p125 = pneg %p124
      // Predicated region
      $region21: #{tpu_custom_call.1} parent=5 // pred_check
        _
      $region22: #{tpu_custom_call.1} parent=5 // pred_check_branch
        %127 = sbr.rel (%p124) target = $region24
      $region23: #{tpu_custom_call.1} parent=5 // pred_region
        %s128 = ssub.s32 %s13, 1
        %s129 = sand.u32 %s40, 1
        %s130 = scalar_lea.sflag [#allocation3], %s129
        %s131 = sand.u32 %s40, 1
        %s132 = smul.addr %s131, 64
        %s133 = scalar_lea.vmem [#allocation2], %s132
        // Predicated region
        $region25: #{tpu_custom_call.1} parent=23 // pred_check
          %p134 = pneg %p53
        $region26: #{tpu_custom_call.1} parent=23 // pred_check_branch
          %136 = sbr.rel (%p134) target = $region28
        $region27: #{tpu_custom_call.1} parent=23 // pred_region
          %137 = dma.done %s130, 1024
        $region28: #{tpu_custom_call.1} parent=23 // pred_fallthru
          _
        %s138 = sand.u32 %s40, 1
        %s139 = scalar_lea.sflag [#allocation3], %s138
        %s140 = sand.u32 %s40, 1
        %s141 = smul.addr %s140, 64
        %s142 = scalar_lea.vmem [#allocation2], %s141
        %p143 = pneg %p53
        %p144 = pneg %p50
        %p145 = pneg %p81
        %p146 = pneg %p78
        %s147 = sand.u32 %s68, 1
        %s148 = scalar_lea.sflag [#allocation4], %s147
        %s149 = sand.u32 %s68, 1
        %s150 = smul.addr %s149, 16
        %s151 = scalar_lea.vmem [#allocation5], %s150
        %s152 = smul.u32 2, %s23
        %v153 = vld [vmem:[%s133] sm:$0xff]
        %v154 = vld [vmem:[%s133 + $0x8] sm:$0xff]
        %v155 = vld [vmem:[%s133 + $0x10] sm:$0xff]
        %v156 = vld [vmem:[%s133 + $0x18] sm:$0xff]
        %v157 = vld [vmem:[%s133 + $0x20] sm:$0xff]
        %v158 = vld [vmem:[%s133 + $0x28] sm:$0xff]
        %v159 = vld [vmem:[%s133 + $0x30] sm:$0xff]
        %v160 = vld [vmem:[%s133 + $0x38] sm:$0xff]
        %v169 = vcombine.high %v153, %v153
        %v171 = vunpack.c.l.s4 1983009808
        %v172 = vunpack.c.0.s8 %v171
        %v173 = vlaneseq
        %v174 = vshrl.u32 %v173, 7
        %v175 = vsub.s32 %v172, %v174
        %v176 = vrot.slane %v153, %v175
        %v178 = vunpack.c.l.s4 1983009808
        %v179 = vunpack.c.0.s8 %v178
        %v180 = vlaneseq
        %v181 = vshrl.u32 %v180, 7
        %v182 = vsub.s32 %v179, %v181
        %v183 = vrot.slane %v169, %v182
        %v184 = vcombine.high %v176, %v176
        %v185 = vcombine.high %v183, %v183
        %v186 = vcombine.high %v154, %v154
        %v188 = vunpack.c.l.s4 1983009808
        %v189 = vunpack.c.0.s8 %v188
        %v190 = vlaneseq
        %v191 = vshrl.u32 %v190, 7
        %v192 = vsub.s32 %v189, %v191
        %v193 = vrot.slane %v154, %v192
        %v195 = vunpack.c.l.s4 1983009808
        %v196 = vunpack.c.0.s8 %v195
        %v197 = vlaneseq
        %v198 = vshrl.u32 %v197, 7
        %v199 = vsub.s32 %v196, %v198
        %v200 = vrot.slane %v186, %v199
        %v201 = vcombine.high %v193, %v193
        %v202 = vcombine.high %v200, %v200
        %v203 = vcombine.high %v155, %v155
        %v205 = vunpack.c.l.s4 1983009808
        %v206 = vunpack.c.0.s8 %v205
        %v207 = vlaneseq
        %v208 = vshrl.u32 %v207, 7
        %v209 = vsub.s32 %v206, %v208
        %v210 = vrot.slane %v155, %v209
        %v212 = vunpack.c.l.s4 1983009808
        %v213 = vunpack.c.0.s8 %v212
        %v214 = vlaneseq
        %v215 = vshrl.u32 %v214, 7
        %v216 = vsub.s32 %v213, %v215
        %v217 = vrot.slane %v203, %v216
        %v218 = vcombine.high %v210, %v210
        %v219 = vcombine.high %v217, %v217
        %v220 = vcombine.high %v156, %v156
        %v222 = vunpack.c.l.s4 1983009808
        %v223 = vunpack.c.0.s8 %v222
        %v224 = vlaneseq
        %v225 = vshrl.u32 %v224, 7
        %v226 = vsub.s32 %v223, %v225
        %v227 = vrot.slane %v156, %v226
        %v229 = vunpack.c.l.s4 1983009808
        %v230 = vunpack.c.0.s8 %v229
        %v231 = vlaneseq
        %v232 = vshrl.u32 %v231, 7
        %v233 = vsub.s32 %v230, %v232
        %v234 = vrot.slane %v220, %v233
        %v235 = vcombine.high %v227, %v227
        %v236 = vcombine.high %v234, %v234
        %v237 = vcombine.high %v157, %v157
        %v239 = vunpack.c.l.s4 1983009808
        %v240 = vunpack.c.0.s8 %v239
        %v241 = vlaneseq
        %v242 = vshrl.u32 %v241, 7
        %v243 = vsub.s32 %v240, %v242
        %v244 = vrot.slane %v157, %v243
        %v246 = vunpack.c.l.s4 1983009808
        %v247 = vunpack.c.0.s8 %v246
        %v248 = vlaneseq
        %v249 = vshrl.u32 %v248, 7
        %v250 = vsub.s32 %v247, %v249
        %v251 = vrot.slane %v237, %v250
        %v252 = vcombine.high %v244, %v244
        %v253 = vcombine.high %v251, %v251
        %v254 = vcombine.high %v158, %v158
        %v256 = vunpack.c.l.s4 1983009808
        %v257 = vunpack.c.0.s8 %v256
        %v258 = vlaneseq
        %v259 = vshrl.u32 %v258, 7
        %v260 = vsub.s32 %v257, %v259
        %v261 = vrot.slane %v158, %v260
        %v263 = vunpack.c.l.s4 1983009808
        %v264 = vunpack.c.0.s8 %v263
        %v265 = vlaneseq
        %v266 = vshrl.u32 %v265, 7
        %v267 = vsub.s32 %v264, %v266
        %v268 = vrot.slane %v254, %v267
        %v269 = vcombine.high %v261, %v261
        %v270 = vcombine.high %v268, %v268
        %v271 = vcombine.high %v159, %v159
        %v273 = vunpack.c.l.s4 1983009808
        %v274 = vunpack.c.0.s8 %v273
        %v275 = vlaneseq
        %v276 = vshrl.u32 %v275, 7
        %v277 = vsub.s32 %v274, %v276
        %v278 = vrot.slane %v159, %v277
        %v280 = vunpack.c.l.s4 1983009808
        %v281 = vunpack.c.0.s8 %v280
        %v282 = vlaneseq
        %v283 = vshrl.u32 %v282, 7
        %v284 = vsub.s32 %v281, %v283
        %v285 = vrot.slane %v271, %v284
        %v286 = vcombine.high %v278, %v278
        %v287 = vcombine.high %v285, %v285
        %v288 = vcombine.high %v160, %v160
        %v290 = vunpack.c.l.s4 1983009808
        %v291 = vunpack.c.0.s8 %v290
        %v292 = vlaneseq
        %v293 = vshrl.u32 %v292, 7
        %v294 = vsub.s32 %v291, %v293
        %v295 = vrot.slane %v160, %v294
        %v297 = vunpack.c.l.s4 1983009808
        %v298 = vunpack.c.0.s8 %v297
        %v299 = vlaneseq
        %v300 = vshrl.u32 %v299, 7
        %v301 = vsub.s32 %v298, %v300
        %v302 = vrot.slane %v288, %v301
        %v303 = vcombine.high %v295, %v295
        %v304 = vcombine.high %v302, %v302
        %vm337 = vcmask 123904
        %v338 = vsel %vm337, %v176, 0.0
        %v339 = vrot.slane %v338, 4
        %v340 = vadd.f32 %v338, %v339
        %v341 = vrot.slane %v340, 2
        %v342 = vadd.f32 %v340, %v341
        %v343 = vrot.slane %v342, 1
        %v344 = vadd.f32 %v342, %v343
        %v345 = vsel %vm337, %v184, 0.0
        %v346 = vrot.slane %v345, 4
        %v347 = vadd.f32 %v345, %v346
        %v348 = vrot.slane %v347, 2
        %v349 = vadd.f32 %v347, %v348
        %v350 = vrot.slane %v349, 1
        %v351 = vadd.f32 %v349, %v350
        %v352 = vsel %vm337, %v183, 0.0
        %v353 = vrot.slane %v352, 4
        %v354 = vadd.f32 %v352, %v353
        %v355 = vrot.slane %v354, 2
        %v356 = vadd.f32 %v354, %v355
        %v357 = vrot.slane %v356, 1
        %v358 = vadd.f32 %v356, %v357
        %v359 = vsel %vm337, %v185, 0.0
        %v360 = vrot.slane %v359, 4
        %v361 = vadd.f32 %v359, %v360
        %v362 = vrot.slane %v361, 2
        %v363 = vadd.f32 %v361, %v362
        %v364 = vrot.slane %v363, 1
        %v365 = vadd.f32 %v363, %v364
        %v366 = vsel %vm337, %v193, 0.0
        %v367 = vrot.slane %v366, 4
        %v368 = vadd.f32 %v366, %v367
        %v369 = vrot.slane %v368, 2
        %v370 = vadd.f32 %v368, %v369
        %v371 = vrot.slane %v370, 1
        %v372 = vadd.f32 %v370, %v371
        %v373 = vsel %vm337, %v201, 0.0
        %v374 = vrot.slane %v373, 4
        %v375 = vadd.f32 %v373, %v374
        %v376 = vrot.slane %v375, 2
        %v377 = vadd.f32 %v375, %v376
        %v378 = vrot.slane %v377, 1
        %v379 = vadd.f32 %v377, %v378
        %v380 = vsel %vm337, %v200, 0.0
        %v381 = vrot.slane %v380, 4
        %v382 = vadd.f32 %v380, %v381
        %v383 = vrot.slane %v382, 2
        %v384 = vadd.f32 %v382, %v383
        %v385 = vrot.slane %v384, 1
        %v386 = vadd.f32 %v384, %v385
        %v387 = vsel %vm337, %v202, 0.0
        %v388 = vrot.slane %v387, 4
        %v389 = vadd.f32 %v387, %v388
        %v390 = vrot.slane %v389, 2
        %v391 = vadd.f32 %v389, %v390
        %v392 = vrot.slane %v391, 1
        %v393 = vadd.f32 %v391, %v392
        %v394 = vsel %vm337, %v210, 0.0
        %v395 = vrot.slane %v394, 4
        %v396 = vadd.f32 %v394, %v395
        %v397 = vrot.slane %v396, 2
        %v398 = vadd.f32 %v396, %v397
        %v399 = vrot.slane %v398, 1
        %v400 = vadd.f32 %v398, %v399
        %v401 = vsel %vm337, %v218, 0.0
        %v402 = vrot.slane %v401, 4
        %v403 = vadd.f32 %v401, %v402
        %v404 = vrot.slane %v403, 2
        %v405 = vadd.f32 %v403, %v404
        %v406 = vrot.slane %v405, 1
        %v407 = vadd.f32 %v405, %v406
        %v408 = vsel %vm337, %v217, 0.0
        %v409 = vrot.slane %v408, 4
        %v410 = vadd.f32 %v408, %v409
        %v411 = vrot.slane %v410, 2
        %v412 = vadd.f32 %v410, %v411
        %v413 = vrot.slane %v412, 1
        %v414 = vadd.f32 %v412, %v413
        %v415 = vsel %vm337, %v219, 0.0
        %v416 = vrot.slane %v415, 4
        %v417 = vadd.f32 %v415, %v416
        %v418 = vrot.slane %v417, 2
        %v419 = vadd.f32 %v417, %v418
        %v420 = vrot.slane %v419, 1
        %v421 = vadd.f32 %v419, %v420
        %v422 = vsel %vm337, %v227, 0.0
        %v423 = vrot.slane %v422, 4
        %v424 = vadd.f32 %v422, %v423
        %v425 = vrot.slane %v424, 2
        %v426 = vadd.f32 %v424, %v425
        %v427 = vrot.slane %v426, 1
        %v428 = vadd.f32 %v426, %v427
        %v429 = vsel %vm337, %v235, 0.0
        %v430 = vrot.slane %v429, 4
        %v431 = vadd.f32 %v429, %v430
        %v432 = vrot.slane %v431, 2
        %v433 = vadd.f32 %v431, %v432
        %v434 = vrot.slane %v433, 1
        %v435 = vadd.f32 %v433, %v434
        %v436 = vsel %vm337, %v234, 0.0
        %v437 = vrot.slane %v436, 4
        %v438 = vadd.f32 %v436, %v437
        %v439 = vrot.slane %v438, 2
        %v440 = vadd.f32 %v438, %v439
        %v441 = vrot.slane %v440, 1
        %v442 = vadd.f32 %v440, %v441
        %v443 = vsel %vm337, %v236, 0.0
        %v444 = vrot.slane %v443, 4
        %v445 = vadd.f32 %v443, %v444
        %v446 = vrot.slane %v445, 2
        %v447 = vadd.f32 %v445, %v446
        %v448 = vrot.slane %v447, 1
        %v449 = vadd.f32 %v447, %v448
        %v450 = vsel %vm337, %v244, 0.0
        %v451 = vrot.slane %v450, 4
        %v452 = vadd.f32 %v450, %v451
        %v453 = vrot.slane %v452, 2
        %v454 = vadd.f32 %v452, %v453
        %v455 = vrot.slane %v454, 1
        %v456 = vadd.f32 %v454, %v455
        %v457 = vsel %vm337, %v252, 0.0
        %v458 = vrot.slane %v457, 4
        %v459 = vadd.f32 %v457, %v458
        %v460 = vrot.slane %v459, 2
        %v461 = vadd.f32 %v459, %v460
        %v462 = vrot.slane %v461, 1
        %v463 = vadd.f32 %v461, %v462
        %v464 = vsel %vm337, %v251, 0.0
        %v465 = vrot.slane %v464, 4
        %v466 = vadd.f32 %v464, %v465
        %v467 = vrot.slane %v466, 2
        %v468 = vadd.f32 %v466, %v467
        %v469 = vrot.slane %v468, 1
        %v470 = vadd.f32 %v468, %v469
        %v471 = vsel %vm337, %v253, 0.0
        %v472 = vrot.slane %v471, 4
        %v473 = vadd.f32 %v471, %v472
        %v474 = vrot.slane %v473, 2
        %v475 = vadd.f32 %v473, %v474
        %v476 = vrot.slane %v475, 1
        %v477 = vadd.f32 %v475, %v476
        %v478 = vsel %vm337, %v261, 0.0
        %v479 = vrot.slane %v478, 4
        %v480 = vadd.f32 %v478, %v479
        %v481 = vrot.slane %v480, 2
        %v482 = vadd.f32 %v480, %v481
        %v483 = vrot.slane %v482, 1
        %v484 = vadd.f32 %v482, %v483
        %v485 = vsel %vm337, %v269, 0.0
        %v486 = vrot.slane %v485, 4
        %v487 = vadd.f32 %v485, %v486
        %v488 = vrot.slane %v487, 2
        %v489 = vadd.f32 %v487, %v488
        %v490 = vrot.slane %v489, 1
        %v491 = vadd.f32 %v489, %v490
        %v492 = vsel %vm337, %v268, 0.0
        %v493 = vrot.slane %v492, 4
        %v494 = vadd.f32 %v492, %v493
        %v495 = vrot.slane %v494, 2
        %v496 = vadd.f32 %v494, %v495
        %v497 = vrot.slane %v496, 1
        %v498 = vadd.f32 %v496, %v497
        %v499 = vsel %vm337, %v270, 0.0
        %v500 = vrot.slane %v499, 4
        %v501 = vadd.f32 %v499, %v500
        %v502 = vrot.slane %v501, 2
        %v503 = vadd.f32 %v501, %v502
        %v504 = vrot.slane %v503, 1
        %v505 = vadd.f32 %v503, %v504
        %v506 = vsel %vm337, %v278, 0.0
        %v507 = vrot.slane %v506, 4
        %v508 = vadd.f32 %v506, %v507
        %v509 = vrot.slane %v508, 2
        %v510 = vadd.f32 %v508, %v509
        %v511 = vrot.slane %v510, 1
        %v512 = vadd.f32 %v510, %v511
        %v513 = vsel %vm337, %v286, 0.0
        %v514 = vrot.slane %v513, 4
        %v515 = vadd.f32 %v513, %v514
        %v516 = vrot.slane %v515, 2
        %v517 = vadd.f32 %v515, %v516
        %v518 = vrot.slane %v517, 1
        %v519 = vadd.f32 %v517, %v518
        %v520 = vsel %vm337, %v285, 0.0
        %v521 = vrot.slane %v520, 4
        %v522 = vadd.f32 %v520, %v521
        %v523 = vrot.slane %v522, 2
        %v524 = vadd.f32 %v522, %v523
        %v525 = vrot.slane %v524, 1
        %v526 = vadd.f32 %v524, %v525
        %v527 = vsel %vm337, %v287, 0.0
        %v528 = vrot.slane %v527, 4
        %v529 = vadd.f32 %v527, %v528
        %v530 = vrot.slane %v529, 2
        %v531 = vadd.f32 %v529, %v530
        %v532 = vrot.slane %v531, 1
        %v533 = vadd.f32 %v531, %v532
        %v534 = vsel %vm337, %v295, 0.0
        %v535 = vrot.slane %v534, 4
        %v536 = vadd.f32 %v534, %v535
        %v537 = vrot.slane %v536, 2
        %v538 = vadd.f32 %v536, %v537
        %v539 = vrot.slane %v538, 1
        %v540 = vadd.f32 %v538, %v539
        %v541 = vsel %vm337, %v303, 0.0
        %v542 = vrot.slane %v541, 4
        %v543 = vadd.f32 %v541, %v542
        %v544 = vrot.slane %v543, 2
        %v545 = vadd.f32 %v543, %v544
        %v546 = vrot.slane %v545, 1
        %v547 = vadd.f32 %v545, %v546
        %v548 = vsel %vm337, %v302, 0.0
        %v549 = vrot.slane %v548, 4
        %v550 = vadd.f32 %v548, %v549
        %v551 = vrot.slane %v550, 2
        %v552 = vadd.f32 %v550, %v551
        %v553 = vrot.slane %v552, 1
        %v554 = vadd.f32 %v552, %v553
        %v555 = vsel %vm337, %v304, 0.0
        %v556 = vrot.slane %v555, 4
        %v557 = vadd.f32 %v555, %v556
        %v558 = vrot.slane %v557, 2
        %v559 = vadd.f32 %v557, %v558
        %v560 = vrot.slane %v559, 1
        %v561 = vadd.f32 %v559, %v560
        %v562 = vrcp.pop 2.0
        %v563 = vmul.f32 %v344, %v562
        %v564 = vmul.f32 %v351, %v562
        %v565 = vmul.f32 %v358, %v562
        %v566 = vmul.f32 %v365, %v562
        %v567 = vmul.f32 %v372, %v562
        %v568 = vmul.f32 %v379, %v562
        %v569 = vmul.f32 %v386, %v562
        %v570 = vmul.f32 %v393, %v562
        %v571 = vmul.f32 %v400, %v562
        %v572 = vmul.f32 %v407, %v562
        %v573 = vmul.f32 %v414, %v562
        %v574 = vmul.f32 %v421, %v562
        %v575 = vmul.f32 %v428, %v562
        %v576 = vmul.f32 %v435, %v562
        %v577 = vmul.f32 %v442, %v562
        %v578 = vmul.f32 %v449, %v562
        %v579 = vmul.f32 %v456, %v562
        %v580 = vmul.f32 %v463, %v562
        %v581 = vmul.f32 %v470, %v562
        %v582 = vmul.f32 %v477, %v562
        %v583 = vmul.f32 %v484, %v562
        %v584 = vmul.f32 %v491, %v562
        %v585 = vmul.f32 %v498, %v562
        %v586 = vmul.f32 %v505, %v562
        %v587 = vmul.f32 %v512, %v562
        %v588 = vmul.f32 %v519, %v562
        %v589 = vmul.f32 %v526, %v562
        %v590 = vmul.f32 %v533, %v562
        %v591 = vmul.f32 %v540, %v562
        %v592 = vmul.f32 %v547, %v562
        %v593 = vmul.f32 %v554, %v562
        %v594 = vmul.f32 %v561, %v562
        %vm627 = vcmask 1041409
        %v628 = vsel %vm627, %v564, %v563
        %vm629 = vcmask 1042434
        %v630 = vsel %vm629, %v565, %v628
        %vm631 = vcmask 1043459
        %v632 = vsel %vm631, %v566, %v630
        %vm633 = vcmask 1044484
        %v634 = vsel %vm633, %v567, %v632
        %vm635 = vcmask 1045509
        %v636 = vsel %vm635, %v568, %v634
        %vm637 = vcmask 1046534
        %v638 = vsel %vm637, %v569, %v636
        %vm639 = vcmask 1047559
        %v640 = vsel %vm639, %v570, %v638
        %v641 = vsel %vm627, %v572, %v571
        %v642 = vsel %vm629, %v573, %v641
        %v643 = vsel %vm631, %v574, %v642
        %v644 = vsel %vm633, %v575, %v643
        %v645 = vsel %vm635, %v576, %v644
        %v646 = vsel %vm637, %v577, %v645
        %v647 = vsel %vm639, %v578, %v646
        %v648 = vsel %vm627, %v580, %v579
        %v649 = vsel %vm629, %v581, %v648
        %v650 = vsel %vm631, %v582, %v649
        %v651 = vsel %vm633, %v583, %v650
        %v652 = vsel %vm635, %v584, %v651
        %v653 = vsel %vm637, %v585, %v652
        %v654 = vsel %vm639, %v586, %v653
        %v655 = vsel %vm627, %v588, %v587
        %v656 = vsel %vm629, %v589, %v655
        %v657 = vsel %vm631, %v590, %v656
        %v658 = vsel %vm633, %v591, %v657
        %v659 = vsel %vm635, %v592, %v658
        %v660 = vsel %vm637, %v593, %v659
        %v661 = vsel %vm639, %v594, %v660
        %666 = vxpose.xlu0.b32.start [1/16] %v640, 128
        %667 = vxpose.xlu0.b32.cont [2/16] %v647, 128
        %668 = vxpose.xlu0.b32.cont [3/16] %v654, 128
        %669 = vxpose.xlu0.b32.cont [4/16] %v661, 128
        %670 = vxpose.xlu0.b32.cont [5/16] 0.0, 128
        %671 = vxpose.xlu0.b32.cont [6/16] 0.0, 128
        %672 = vxpose.xlu0.b32.cont [7/16] 0.0, 128
        %673 = vxpose.xlu0.b32.cont [8/16] 0.0, 128
        %674 = vxpose.xlu0.b32.cont [9/16] 0.0, 128
        %675 = vxpose.xlu0.b32.cont [10/16] 0.0, 128
        %676 = vxpose.xlu0.b32.cont [11/16] 0.0, 128
        %677 = vxpose.xlu0.b32.cont [12/16] 0.0, 128
        %678 = vxpose.xlu0.b32.cont [13/16] 0.0, 128
        %679 = vxpose.xlu0.b32.cont [14/16] 0.0, 128
        %680 = vxpose.xlu0.b32.cont [15/16] 0.0, 128
        %681 = vxpose.xlu0.b32.end [16/16] 0.0, 128
        %v682 = vpop.trf.xlu0
        %v683 = vpop.trf.xlu0
        %v684 = vpop.trf.xlu0
        %v685 = vpop.trf.xlu0
        %v686 = vpop.trf.xlu0
        %v687 = vpop.trf.xlu0
        %v688 = vpop.trf.xlu0
        %v689 = vpop.trf.xlu0
        %v690 = vpop.trf.xlu0
        %v691 = vpop.trf.xlu0
        %v692 = vpop.trf.xlu0
        %v693 = vpop.trf.xlu0
        %v694 = vpop.trf.xlu0
        %v695 = vpop.trf.xlu0
        %v696 = vpop.trf.xlu0
        %v697 = vpop.trf.xlu0
        %vm698 = vcmask 261120
        %699 = vst.msk [vmem:[%s151] sm:$0xff] %vm698, %v682
        %700 = vst.msk [vmem:[%s151 + $0x8] sm:$0xff] %vm698, %v683
        %s701 = sand.u32 %s68, 1
        %s702 = scalar_lea.sflag [#allocation4], %s701
        %s703 = sand.u32 %s68, 1
        %s704 = smul.addr %s703, 16
        %s705 = scalar_lea.vmem [#allocation5], %s704
        // Predicated region
        $region29: #{tpu_custom_call.1} parent=23 // pred_check
          %p706 = pneg %p78
        $region30: #{tpu_custom_call.1} parent=23 // pred_check_branch
          %708 = sbr.rel (%p706) target = $region32
        $region31: #{tpu_custom_call.1} parent=23 // pred_region
          %s709 = smul.u32 2, %s23
          %s711 = ssub.s32 256, 256
          %712 = vsyncadd %s702, %s711
          %s713 = smul.addr %s22, 2
          %s714 = sadd.s32 %s709, %s713
          %s715 = smul.addr %s714, 128
          %s716 = scalar_lea.hbm %s1, %s715
          %s717 = sshll.u32 %s705, 4
          %s718 = int_to_ptr.vmem [resolvable:$true] %s717
          %723 = dma.vmem_to_hbm [thread:$0]  %s718, 256, %s716, %s702, 128, 128, 8
        $region32: #{tpu_custom_call.1} parent=23 // pred_fallthru
          _
      $region24: #{tpu_custom_call.1} parent=5 // pred_fallthru
        _
      %p724 = scmp.le.s32.totalorder 2, %s13
      // Predicated region
      $region33: #{tpu_custom_call.1} parent=5 // pred_check
        %p725 = pneg %p724
      $region34: #{tpu_custom_call.1} parent=5 // pred_check_branch
        %727 = sbr.rel (%p725) target = $region36
      $region35: #{tpu_custom_call.1} parent=5 // pred_region
        %s728 = ssub.s32 %s13, 2
        // Predicated region
        $region37: #{tpu_custom_call.1} parent=35 // pred_check
          %p729 = pneg %p84
        $region38: #{tpu_custom_call.1} parent=35 // pred_check_branch
          %731 = sbr.rel (%p729) target = $region40
        $region39: #{tpu_custom_call.1} parent=35 // pred_region
          %s732 = sand.u32 %s69, 1
          %s733 = scalar_lea.sflag [#allocation4], %s732
          %s734 = sand.u32 %s69, 1
          %s735 = smul.addr %s734, 16
          %s736 = scalar_lea.vmem [#allocation5], %s735
          %737 = dma.done %s733, 256
        $region40: #{tpu_custom_call.1} parent=35 // pred_fallthru
          _
      $region36: #{tpu_custom_call.1} parent=5 // pred_fallthru
        _
    $region6: #{tpu_custom_call.1} parent=1 // loop_footer
      %s17 = sadd.s32 1, %s13
    $region7: #{tpu_custom_call.1} parent=1 // loop_footer_branch
      %12 = sbr.rel target = $region3
    $region8: #{tpu_custom_call.1} parent=1 // loop_exit
      _
    %738 = vsyncpa [#allocation3], 1
    %s739 = scalar_lea.sflag [#allocation3], 1
    %740 = vsyncpa %s739, 1
    %741 = vsyncpa [#allocation4], 1
    %s742 = scalar_lea.sflag [#allocation4], 1
    %743 = vsyncpa %s742, 1

</llo_original>
